<compile_context>
chip_gen: v7x
topology: tpu7x:2x2x1
jax: 0.10.0
libtpu: 0.0.40
codegen_flags: <defaults>
</compile_context>

<pallas_src>
import jax
import jax.numpy as jnp
from jax.experimental import pallas as pl
from jax.experimental.pallas import tpu as pltpu


def _cdiv(a, b):
    return -(-a // b)


def _round_up(a, b):
    return _cdiv(a, b) * b


def _lora_kernel(x_ref, w1_ref, w2_ref, o_ref, t1_ref):
    """out tile = (x_tile @ W1) @ W2.

    Grid = (batch tiles, out_dim tiles). t1 = x @ W1 (the dominant matmul,
    K = in_dim) is computed once per batch tile and cached in VMEM scratch;
    each out tile then does only the cheap (tm, r) x (r, tn) matmul.
    """
    j = pl.program_id(1)

    @pl.when(j == 0)
    def _():
        t1 = jnp.dot(x_ref[...], w1_ref[...],
                     preferred_element_type=jnp.float32)          # (tm, r)
        # Cast back to operand dtype so the next dot is a native (bf16) MXU
        # matmul instead of a multi-pass f32 one. (Slightly relaxed precision
        # on t1; acceptable for LoRA.)
        t1_ref[...] = t1.astype(t1_ref.dtype)

    out = jnp.dot(t1_ref[...], w2_ref[...],
                  preferred_element_type=jnp.float32)             # (tm, tn)
    o_ref[...] = out.astype(o_ref.dtype)


def lora_forward(x, Aaux, Atrain, Btrain, Baux, *,
                 block_batch=512, block_out=4096,
                 compute_dtype=jnp.bfloat16):
    """LoRA forward: x @ (Aaux @ (Atrain @ Btrain) @ Baux).

    compute_dtype: dtype of streamed x and resident weights inside the kernel
    (bf16 default halves HBM traffic and doubles MXU rate; pass jnp.float32
    or None for exact-parity precision). Output keeps x.dtype.
    """
    in_dim, a_dim = Aaux.shape
    b_dim, out_dim = Baux.shape
    out_dtype = x.dtype
    if compute_dtype is None:
        compute_dtype = x.dtype

    # --- Fold the rank product into whichever aux factor keeps the smaller
    # --- inner dim; the kernel then does just 2 dots per tile.
    ab = jnp.dot(Atrain.astype(jnp.float32), Btrain.astype(jnp.float32),
                 preferred_element_type=jnp.float32)              # (a_dim, b_dim)
    if a_dim <= b_dim:
        r = a_dim
        W1 = Aaux.astype(jnp.float32)                             # (in_dim, r)
        W2 = jnp.dot(ab, Baux.astype(jnp.float32),
                     preferred_element_type=jnp.float32)          # (r, out_dim)
    else:
        r = b_dim
        W1 = jnp.dot(Aaux.astype(jnp.float32), ab,
                     preferred_element_type=jnp.float32)          # (in_dim, r)
        W2 = Baux.astype(jnp.float32)                             # (r, out_dim)
    W1 = W1.astype(compute_dtype)
    W2 = W2.astype(compute_dtype)

    # --- Flatten leading dims like PyTorch's `x @ A`; cast x once.
    lead_shape = x.shape[:-1]
    x2 = x.reshape(-1, in_dim).astype(compute_dtype)
    B = x2.shape[0]

    # --- Lane-dense output: pad out_dim to a multiple of 128 by padding the
    # --- tiny resident W2 (no activation copy); slice columns off afterwards.
    out_dim_p = _round_up(out_dim, 128)
    if out_dim_p != out_dim:
        W2 = jnp.pad(W2, ((0, 0), (0, out_dim_p - out_dim)))

    # --- Batch tile: big (mem-bound kernel), multiple of 8, and split into
    # --- >= 2 balanced tiles when possible so both v7x TCs get grid work.
    # --- No padding of x: Pallas masks the ragged last tile.
    bb = max(8, (block_batch // 8) * 8)
    tm = min(bb, B)
    if tm >= 16:
        tm = min(tm, 8 * _cdiv(_cdiv(B, 2), 8))
    n_i = _cdiv(B, tm)

    # --- out_dim tiling (only kicks in for very wide outputs; keeps tm big
    # --- within v7x's 64 MiB VMEM).
    tn = min(_round_up(block_out, 128), out_dim_p)
    n_j = _cdiv(out_dim_p, tn)

    cd_bytes = jnp.dtype(compute_dtype).itemsize
    out_bytes = jnp.dtype(out_dtype).itemsize

    # --- Explicit VMEM budget: x/out double-buffered, weights single-buffered,
    # --- plus the t1 scratch; headroom for compiler-internal scratch.
    vmem_needed = (2 * tm * in_dim * cd_bytes          # x tile, double-buffered
                   + 2 * tm * tn * out_bytes           # out tile, double-buffered
                   + in_dim * r * cd_bytes             # W1, single-buffered
                   + 2 * r * tn * cd_bytes             # W2 (worst case buffered)
                   + tm * r * cd_bytes)                # t1 scratch
    vmem_limit = min(max(int(1.25 * vmem_needed) + (2 << 20), 32 << 20), 64 << 20)

    cost = pl.CostEstimate(
        flops=2 * B * (in_dim * r + r * out_dim_p),
        transcendentals=0,
        bytes_accessed=(B * in_dim * cd_bytes
                        + B * out_dim_p * out_bytes
                        + (in_dim * r + r * out_dim_p) * cd_bytes),
    )

    # Constant-index resident weights: single-buffer to save VMEM. W2 only
    # when it is not tiled over the out axis.
    w2_pipeline = pl.Buffered(1) if n_j == 1 else None

    out = pl.pallas_call(
        _lora_kernel,
        out_shape=jax.ShapeDtypeStruct((B, out_dim_p), out_dtype),
        grid_spec=pltpu.PrefetchScalarGridSpec(
            num_scalar_prefetch=0,
            grid=(n_i, n_j),
            in_specs=[
                # x: tiled over batch, pipelined/double-buffered.
                pl.BlockSpec((tm, in_dim), lambda i, j: (i, 0)),
                # W1: small, fully resident, single-buffered.
                pl.BlockSpec((in_dim, r), lambda i, j: (0, 0),
                             pipeline_mode=pl.Buffered(1)),
                # W2: resident (or tiled over out_dim when very wide).
                pl.BlockSpec((r, tn), lambda i, j: (0, j),
                             pipeline_mode=w2_pipeline),
            ],
            out_specs=pl.BlockSpec((tm, tn), lambda i, j: (i, j)),
            scratch_shapes=[pltpu.VMEM((tm, r), compute_dtype)],
        ),
        compiler_params=pltpu.CompilerParams(
            # Batch tiles independent -> shard across TCs; out axis carries the
            # t1 scratch dependency -> arbitrary (sequential).
            dimension_semantics=("parallel", "arbitrary"),
            vmem_limit_bytes=vmem_limit,
        ),
        cost_estimate=cost,
    )(x2, W1, W2)

    if out_dim_p != out_dim:
        out = out[:, :out_dim]
    return out.reshape(*lead_shape, out_dim)


if __name__ == "__main__":
    # Small shapes consistent with the module's __init__ signature.
    batch, in_dim, out_dim = 8, 32, 32
    a_dim, lora_dim, b_dim = 16, 4, 16
    alpha = 2.0  # stored but unused in forward(); kept for fidelity

    key = jax.random.PRNGKey(0)
    kx, ka, kat, kbt, kb = jax.random.split(key, 5)

    x = jax.random.normal(kx, (batch, in_dim), dtype=jnp.float32)
    Aaux = jax.random.normal(ka, (in_dim, a_dim), dtype=jnp.float32)
    Atrain = jax.random.normal(kat, (a_dim, lora_dim), dtype=jnp.float32)
    Btrain = jax.random.normal(kbt, (lora_dim, b_dim), dtype=jnp.float32)
    Baux = jax.random.normal(kb, (b_dim, out_dim), dtype=jnp.float32)

    # Pure-JAX reference (original association).
    A_ref = Aaux @ (Atrain @ Btrain) @ Baux
    ref = x @ A_ref

    # Exact-precision path (f32 compute): tight check.
    out_f32 = jax.block_until_ready(
        lora_forward(x, Aaux, Atrain, Btrain, Baux, compute_dtype=jnp.float32))
    assert out_f32.shape == (batch, out_dim)
    assert out_f32.dtype == x.dtype
    assert jnp.allclose(out_f32, ref, rtol=2e-3, atol=2e-3), "f32 path mismatch"

    # Default fast path (bf16 operands, f32 accumulation): loose sanity check.
    out_bf16 = jax.block_until_ready(lora_forward(x, Aaux, Atrain, Btrain, Baux))
    assert out_bf16.shape == (batch, out_dim)
    assert out_bf16.dtype == x.dtype
    rel = jnp.linalg.norm(out_bf16 - ref) / jnp.linalg.norm(ref)
    assert bool(jnp.isfinite(rel)) and float(rel) < 0.05, f"bf16 path error {rel}"

    print("KERNEL_OK")
</pallas_src>

<mosaic_0001>
module attributes {stable_mosaic.version = 11 : i64} {
  func.func @_lora_kernel(%arg0: i32, %arg1: i32, %arg2: memref<8x32xf32, #tpu.memory_space<vmem>>, %arg3: memref<32x16xf32, #tpu.memory_space<vmem>>, %arg4: memref<16x128xf32, #tpu.memory_space<vmem>>, %arg5: memref<8x128xf32, #tpu.memory_space<vmem>>, %arg6: memref<8x16xf32, #tpu.memory_space<vmem>>) attributes {dimension_semantics = [#tpu.dimension_semantics<parallel>, #tpu.dimension_semantics<arbitrary>], iteration_bounds = array<i64: 1, 1>, scalar_prefetch = 0 : i64, scratch_operands = 1 : i64, tpu.core_type = #tpu.core_type<tc>, window_params = [{transform_indices = @transform_0, window_bounds = array<i64: 8, 32>}, {pipeline_mode = #tpu.pipeline_mode<synchronous>, transform_indices = @transform_1, window_bounds = array<i64: 32, 16>}, {pipeline_mode = #tpu.pipeline_mode<synchronous>, transform_indices = @transform_2, window_bounds = array<i64: 16, 128>}, {transform_indices = @transform_3, window_bounds = array<i64: 8, 128>}]} {
    %c0_i32 = arith.constant 0 : i32
    %0 = arith.cmpi eq, %arg1, %c0_i32 : i32
    %1 = arith.extui %0 : i1 to i32
    %c0_i32_0 = arith.constant 0 : i32
    %2 = arith.cmpi ne, %1, %c0_i32_0 : i32
    scf.if %2 {
      %c0_6 = arith.constant 0 : index
      %c0_7 = arith.constant 0 : index
      %7 = vector.load %arg2[%c0_6, %c0_7] : memref<8x32xf32, #tpu.memory_space<vmem>>, vector<8x32xf32>
      %c0_8 = arith.constant 0 : index
      %c0_9 = arith.constant 0 : index
      %8 = vector.load %arg3[%c0_8, %c0_9] : memref<32x16xf32, #tpu.memory_space<vmem>>, vector<32x16xf32>
      %cst_10 = arith.constant dense<0.000000e+00> : vector<8x16xf32>
      %9 = tpu.matmul %7, %8, %cst_10 {dimension_numbers = #tpu.dot_dimension_numbers<[1], [0], [0], [1], [0, 0, 1, 1], [], []>} : vector<8x32xf32>, vector<32x16xf32>, vector<8x16xf32> -> vector<8x16xf32>
      %c0_11 = arith.constant 0 : index
      %c0_12 = arith.constant 0 : index
      %10 = vector.load %arg6[%c0_11, %c0_12] : memref<8x16xf32, #tpu.memory_space<vmem>>, vector<8x16xf32>
      tpu.vector_store %arg6[%c0_11, %c0_12], %9 {strides = array<i32>} : memref<8x16xf32, #tpu.memory_space<vmem>>, vector<8x16xf32>,
    } else {
    }
    %c0 = arith.constant 0 : index
    %c0_1 = arith.constant 0 : index
    %3 = vector.load %arg6[%c0, %c0_1] : memref<8x16xf32, #tpu.memory_space<vmem>>, vector<8x16xf32>
    %c0_2 = arith.constant 0 : index
    %c0_3 = arith.constant 0 : index
    %4 = vector.load %arg4[%c0_2, %c0_3] : memref<16x128xf32, #tpu.memory_space<vmem>>, vector<16x128xf32>
    %cst = arith.constant dense<0.000000e+00> : vector<8x128xf32>
    %5 = tpu.matmul %3, %4, %cst {dimension_numbers = #tpu.dot_dimension_numbers<[1], [0], [0], [1], [0, 0, 1, 1], [], []>} : vector<8x16xf32>, vector<16x128xf32>, vector<8x128xf32> -> vector<8x128xf32>
    %c0_4 = arith.constant 0 : index
    %c0_5 = arith.constant 0 : index
    %6 = vector.load %arg5[%c0_4, %c0_5] : memref<8x128xf32, #tpu.memory_space<vmem>>, vector<8x128xf32>
    tpu.vector_store %arg5[%c0_4, %c0_5], %5 {strides = array<i32>} : memref<8x128xf32, #tpu.memory_space<vmem>>, vector<8x128xf32>,
    return
  }
  func.func @transform_0(%arg0: i32, %arg1: i32) -> (i32, i32) {
    %c0_i32 = arith.constant 0 : i32
    %c0_i32_0 = arith.constant 0 : i32
    return %arg0, %c0_i32 : i32, i32
  }
  func.func @transform_1(%arg0: i32, %arg1: i32) -> (i32, i32) {
    %c0_i32 = arith.constant 0 : i32
    %c0_i32_0 = arith.constant 0 : i32
    %c0_i32_1 = arith.constant 0 : i32
    return %c0_i32, %c0_i32_0 : i32, i32
  }
  func.func @transform_2(%arg0: i32, %arg1: i32) -> (i32, i32) {
    %c0_i32 = arith.constant 0 : i32
    %c0_i32_0 = arith.constant 0 : i32
    return %c0_i32, %arg1 : i32, i32
  }
  func.func @transform_3(%arg0: i32, %arg1: i32) -> (i32, i32) {
    %c0_i32 = arith.constant 0 : i32
    return %arg0, %arg1 : i32, i32
  }
}

</mosaic_0001>

<llo_original>
// kernel: tpu_custom_call.1
$region0: #{tpu_custom_call.1}
  #allocation0 [shape = 'u32[]', space=smem, size = 0x4, offset = 0x4, fixed_abs, tag = 'smem constant byte address 0x4 - core index']
  #allocation1 [shape = 'u32[144,128]{1,0:T(1,128)}', space=vmem, size = 0x12000, scoped, tag = 'internal scratch']
  #allocation2 [shape = 'f32[8,16]{1,0:T(8,128)}', space=vmem, size = 0x1000, scoped, tag = 'scratch operand']
  %s0 = inlined_call_operand.vmem [shape: f32[8,32], index: 0, kind: input, shape index: {}]
  %s1 = inlined_call_operand.vmem [shape: f32[32,16], index: 1, kind: input, shape index: {}]
  %s2 = inlined_call_operand.vmem [shape: f32[16,128], index: 2, kind: input, shape index: {}]
  %s3 = inlined_call_operand.hbm [shape: f32[8,128], index: 3, kind: output, shape index: {}]
  %s4 = sld [smem:[#allocation0]]
  $region26: #{tpu_custom_call.1} parent=0
    _
  %s6 = ssub.s32 1, %s4
  %s7 = scalar_select 0, %s6, %s4
  $region1: #{tpu_custom_call.1} parent=0
    #allocation3 [shape = 'u8[4096]{0}', space=vmem, size = 0x1000, scoped, tag = 'output window, operand 0, single buffered']
    #allocation4 [shape = 's32[1]{0}', space=sflag, size = 0x4, scoped, tag = 'scoped memory for tpu_custom_call.1']
    %8 = vsyncpa [#allocation4], 0
    // Predicated region
    $region2: #{tpu_custom_call.1} parent=1 // pred_check
      _
    $region3: #{tpu_custom_call.1} parent=1 // pred_check_branch
      %10 = sbr.rel (0) target = $region5
    $region4: #{tpu_custom_call.1} parent=1 // pred_region
      _
    $region5: #{tpu_custom_call.1} parent=1 // pred_fallthru
      _
    // Predicated region
    $region6: #{tpu_custom_call.1} parent=1 // pred_check
      _
    $region7: #{tpu_custom_call.1} parent=1 // pred_check_branch
      %12 = sbr.rel (0) target = $region9
    $region8: #{tpu_custom_call.1} parent=1 // pred_region
      _
    $region9: #{tpu_custom_call.1} parent=1 // pred_fallthru
      _
    // Predicated region
    $region10: #{tpu_custom_call.1} parent=1 // pred_check
      _
    $region11: #{tpu_custom_call.1} parent=1 // pred_check_branch
      %14 = sbr.rel (0) target = $region13
    $region12: #{tpu_custom_call.1} parent=1 // pred_region
      _
    $region13: #{tpu_custom_call.1} parent=1 // pred_fallthru
      _
    %p15 = scmp.eq.s32.totalorder 0, 0
    // Predicated region
    $region14: #{tpu_custom_call.1} parent=1 // pred_check
      %p16 = pneg %p15
    $region15: #{tpu_custom_call.1} parent=1 // pred_check_branch
      %18 = sbr.rel (%p16) target = $region17
    $region16: #{tpu_custom_call.1} parent=1 // pred_region
      %v19 = vld [vmem:[%s0] sm:$0xff]
      %v20 = vld [vmem:[%s1] sm:$0xff]
      %v21 = vld [vmem:[%s1 + $0x8] sm:$0xff]
      %v22 = vld [vmem:[%s1 + $0x10] sm:$0xff]
      %v23 = vld [vmem:[%s1 + $0x18] sm:$0xff]
      %vm24 = vcmask 261120
      %v26 = vsel %vm24, %v19, 0
      %28 = vmatprep.subr.mxu0 0.0
      %29 = vmatpush1.msra.mxu0 %v20
      %30 = vmatprep.subr.mxu0 0.0
      %31 = vmatpush1.msra.mxu0 %v21
      %32 = vmatprep.subr.mxu0 0.0
      %33 = vmatpush1.msra.mxu0 %v22
      %34 = vmatprep.subr.mxu0 0.0
      %35 = vmatpush1.msra.mxu0 %v23
      %36 = vmatprep.subr.mxu0 0.0
      %37 = vmatpush1.msra.mxu0 0.0
      %38 = vmatprep.subr.mxu0 0.0
      %39 = vmatpush1.msra.mxu0 0.0
      %40 = vmatprep.subr.mxu0 0.0
      %41 = vmatpush1.msra.mxu0 0.0
      %42 = vmatprep.subr.mxu0 0.0
      %43 = vmatpush1.msra.mxu0 0.0
      %44 = vmatprep.subr.mxu0 0.0
      %45 = vmatpush1.msra.mxu0 0.0
      %46 = vmatprep.subr.mxu0 0.0
      %47 = vmatpush1.msra.mxu0 0.0
      %48 = vmatprep.subr.mxu0 0.0
      %49 = vmatpush1.msra.mxu0 0.0
      %50 = vmatprep.subr.mxu0 0.0
      %51 = vmatpush1.msra.mxu0 0.0
      %52 = vmatprep.subr.mxu0 0.0
      %53 = vmatpush1.msra.mxu0 0.0
      %54 = vmatprep.subr.mxu0 0.0
      %55 = vmatpush1.msra.mxu0 0.0
      %56 = vmatprep.subr.mxu0 0.0
      %57 = vmatpush1.msra.mxu0 0.0
      %58 = vmatprep.subr.mxu0 0.0
      %59 = vmatpush1.msra.mxu0 0.0
      %60 = vmatprep.subr.mxu0 0.0
      %61 = vmatpush1.msra.mxu0 0.0
      %62 = vmatprep.subr.mxu0 0.0
      %63 = vmatpush1.msra.mxu0 0.0
      %64 = vmatprep.subr.mxu0 0.0
      %65 = vmatpush1.msra.mxu0 0.0
      %66 = vmatprep.subr.mxu0 0.0
      %67 = vmatpush1.msra.mxu0 0.0
      %68 = vmatprep.subr.mxu0 0.0
      %69 = vmatpush1.msra.mxu0 0.0
      %70 = vmatprep.subr.mxu0 0.0
      %71 = vmatpush1.msra.mxu0 0.0
      %72 = vmatprep.subr.mxu0 0.0
      %73 = vmatpush1.msra.mxu0 0.0
      %74 = vmatprep.subr.mxu0 0.0
      %75 = vmatpush1.msra.mxu0 0.0
      %76 = vmatprep.subr.mxu0 0.0
      %77 = vmatpush1.msra.mxu0 0.0
      %78 = vmatprep.subr.mxu0 0.0
      %79 = vmatpush1.msra.mxu0 0.0
      %80 = vmatprep.subr.mxu0 0.0
      %81 = vmatpush1.msra.mxu0 0.0
      %82 = vmatprep.subr.mxu0 0.0
      %83 = vmatpush1.msra.mxu0 0.0
      %84 = vmatprep.subr.mxu0 0.0
      %85 = vmatpush1.msra.mxu0 0.0
      %86 = vmatprep.subr.mxu0 0.0
      %87 = vmatpush1.msra.mxu0 0.0
      %88 = vmatprep.subr.mxu0 0.0
      %89 = vmatpush1.msra.mxu0 0.0
      %90 = vmatprep.subr.mxu0 0.0
      %91 = vmatpush1.msra.mxu0 0.0
      %92 = vmatprep.mubr.f32.mxu0 0.0
      %93 = vmatmul.mubr.f32.gmra.mrb[0].mxu0 %v26
      %v94 = vpop.f32.mrb[0].mxu0
      %v95 = vadd.f32 0.0, %v94
      %v96 = vpop.f32.mrb[0].mxu0
      %97 = vdwg.mxu0
      %vm98 = vcmask 130048
      %99 = vst.msk [vmem:[#allocation2] sm:$0xff] %vm98, %v95
    $region17: #{tpu_custom_call.1} parent=1 // pred_fallthru
      _
    %v100 = vld [vmem:[#allocation2] sm:$0xff]
    %v101 = vld [vmem:[%s2] sm:$0xff]
    %v102 = vld [vmem:[%s2 + $0x8] sm:$0xff]
    %vm103 = vcmask 130048
    %v105 = vsel %vm103, %v100, 0
    %107 = vmatprep.subr.mxu0 0.0
    %108 = vmatpush1.msra.mxu0 %v101
    %109 = vmatprep.subr.mxu0 0.0
    %110 = vmatpush1.msra.mxu0 %v102
    %111 = vmatprep.subr.mxu0 0.0
    %112 = vmatpush1.msra.mxu0 0.0
    %113 = vmatprep.subr.mxu0 0.0
    %114 = vmatpush1.msra.mxu0 0.0
    %115 = vmatprep.subr.mxu0 0.0
    %116 = vmatpush1.msra.mxu0 0.0
    %117 = vmatprep.subr.mxu0 0.0
    %118 = vmatpush1.msra.mxu0 0.0
    %119 = vmatprep.subr.mxu0 0.0
    %120 = vmatpush1.msra.mxu0 0.0
    %121 = vmatprep.subr.mxu0 0.0
    %122 = vmatpush1.msra.mxu0 0.0
    %123 = vmatprep.subr.mxu0 0.0
    %124 = vmatpush1.msra.mxu0 0.0
    %125 = vmatprep.subr.mxu0 0.0
    %126 = vmatpush1.msra.mxu0 0.0
    %127 = vmatprep.subr.mxu0 0.0
    %128 = vmatpush1.msra.mxu0 0.0
    %129 = vmatprep.subr.mxu0 0.0
    %130 = vmatpush1.msra.mxu0 0.0
    %131 = vmatprep.subr.mxu0 0.0
    %132 = vmatpush1.msra.mxu0 0.0
    %133 = vmatprep.subr.mxu0 0.0
    %134 = vmatpush1.msra.mxu0 0.0
    %135 = vmatprep.subr.mxu0 0.0
    %136 = vmatpush1.msra.mxu0 0.0
    %137 = vmatprep.subr.mxu0 0.0
    %138 = vmatpush1.msra.mxu0 0.0
    %139 = vmatprep.subr.mxu0 0.0
    %140 = vmatpush1.msra.mxu0 0.0
    %141 = vmatprep.subr.mxu0 0.0
    %142 = vmatpush1.msra.mxu0 0.0
    %143 = vmatprep.subr.mxu0 0.0
    %144 = vmatpush1.msra.mxu0 0.0
    %145 = vmatprep.subr.mxu0 0.0
    %146 = vmatpush1.msra.mxu0 0.0
    %147 = vmatprep.subr.mxu0 0.0
    %148 = vmatpush1.msra.mxu0 0.0
    %149 = vmatprep.subr.mxu0 0.0
    %150 = vmatpush1.msra.mxu0 0.0
    %151 = vmatprep.subr.mxu0 0.0
    %152 = vmatpush1.msra.mxu0 0.0
    %153 = vmatprep.subr.mxu0 0.0
    %154 = vmatpush1.msra.mxu0 0.0
    %155 = vmatprep.subr.mxu0 0.0
    %156 = vmatpush1.msra.mxu0 0.0
    %157 = vmatprep.subr.mxu0 0.0
    %158 = vmatpush1.msra.mxu0 0.0
    %159 = vmatprep.subr.mxu0 0.0
    %160 = vmatpush1.msra.mxu0 0.0
    %161 = vmatprep.subr.mxu0 0.0
    %162 = vmatpush1.msra.mxu0 0.0
    %163 = vmatprep.subr.mxu0 0.0
    %164 = vmatpush1.msra.mxu0 0.0
    %165 = vmatprep.subr.mxu0 0.0
    %166 = vmatpush1.msra.mxu0 0.0
    %167 = vmatprep.subr.mxu0 0.0
    %168 = vmatpush1.msra.mxu0 0.0
    %169 = vmatprep.subr.mxu0 0.0
    %170 = vmatpush1.msra.mxu0 0.0
    %171 = vmatprep.mubr.f32.mxu0 0.0
    %172 = vmatmul.mubr.f32.gmra.mrb[0].mxu0 %v105
    %v173 = vpop.f32.mrb[0].mxu0
    %v174 = vadd.f32 0.0, %v173
    %v175 = vpop.f32.mrb[0].mxu0
    %176 = vdwg.mxu0
    %177 = vst [vmem:[#allocation3] sm:$0xff] %v174
    // Predicated region
    $region18: #{tpu_custom_call.1} parent=1 // pred_check
      _
    $region19: #{tpu_custom_call.1} parent=1 // pred_check_branch
      %179 = sbr.rel (0) target = $region21
    $region20: #{tpu_custom_call.1} parent=1 // pred_region
      %s181 = ssub.s32 128, 128
      %182 = vsyncadd [#allocation4], %s181
      %s184 = sshll.u32 [#allocation3], 4
      %s185 = int_to_ptr.vmem [resolvable:$true] %s184
      %187 = dma.vmem_to_hbm [thread:$0]  %s185, 128, %s3, [#allocation4]
    $region21: #{tpu_custom_call.1} parent=1 // pred_fallthru
      _
    // Predicated region
    $region22: #{tpu_custom_call.1} parent=1 // pred_check
      _
    $region23: #{tpu_custom_call.1} parent=1 // pred_check_branch
      %189 = sbr.rel (0) target = $region25
    $region24: #{tpu_custom_call.1} parent=1 // pred_region
      %190 = dma.done [#allocation4], 128
    $region25: #{tpu_custom_call.1} parent=1 // pred_fallthru
      _
    %191 = vsyncpa [#allocation4], 1

</llo_original>
